<compile_context>
chip_gen: v7x
topology: tpu7x:2x2x1
jax: 0.10.0
libtpu: 0.0.40
codegen_flags: <defaults>
</compile_context>

<pallas_src>
import numpy as np
import jax
import jax.numpy as jnp
from jax import lax
from jax.experimental import pallas as pl
from jax.experimental.pallas import tpu as pltpu


def _round_up(x, m):
    return (x + m - 1) // m * m


def _choose_tile_l(L):
    # Tile the degraded-patch axis so each block stays comfortably inside VMEM
    # (matters for v7x's 64 MiB) while keeping full 8-sublane rows.
    return 512 if L >= 512 else _round_up(L, 8)


# ----------------------------------------------------------------------------
# Pallas kernel: neighbor-matching attention (masked full-score formulation)
# ----------------------------------------------------------------------------
def nbfm_attn_kernel(deg_ref, ref_ref, wmul_ref, madd_ref, out_ref):
    eps2 = 1e-24  # (F.normalize eps = 1e-12)^2 ;  max(||x||, eps) == sqrt(max(ss, eps^2))

    deg = deg_ref[...]          # (TL, Dp)      un-normalized degraded patches
    ref = ref_ref[...]          # (Lr_pad, Dp)  un-normalized reference patches

    # L2-normalize along the patch-feature axis (== F.normalize(dim=-2) on (B, D, L)).
    # rsqrt goes to the EUP slot.
    deg_n = deg * lax.rsqrt(
        jnp.maximum(jnp.sum(deg * deg, axis=-1, keepdims=True), eps2))
    ref_n = ref * lax.rsqrt(
        jnp.maximum(jnp.sum(ref * ref, axis=-1, keepdims=True), eps2))

    # Full similarity matrix on the MXU: (TL, Lr_pad).
    scores = jnp.dot(deg_n, ref_n.T, preferred_element_type=jnp.float32)

    # Gaussian prior (multiplicative) + 3x3-window / padding mask (additive -1e30):
    # out-of-window and padded columns become -1e30 BEFORE the softmax.
    scores = scores * wmul_ref[...] + madd_ref[...]

    # Lane-dense softmax over the padded reference axis (exp(-1e30 - m) == 0).
    m = jnp.max(scores, axis=-1, keepdims=True)
    e = jnp.exp(scores - m)
    attn = e * pl.reciprocal(jnp.sum(e, axis=-1, keepdims=True), approx=True)

    # Weighted aggregation of the *normalized* reference patches — second MXU matmul.
    out_ref[...] = jnp.dot(attn, ref_n, preferred_element_type=jnp.float32)


def _make_score_constants(neighbor_list, weight_flat, L_pad, Lr_pad):
    """Build the combined gaussian weight (mul) and window mask (add) constants.

    wmul[i, nbr[i, j]] = weight[j], 0 elsewhere.
    madd[i, nbr[i, j]] = 0, -1e30 elsewhere (also for padded ref columns).
    Padded degraded rows (>= L) get neutral (0, 0) entries; wrapper slices them off.
    """
    L, NS2 = neighbor_list.shape
    wmul = np.zeros((L_pad, Lr_pad), np.float32)
    madd = np.full((L_pad, Lr_pad), -1e30, np.float32)
    rows = np.repeat(np.arange(L)[:, None], NS2, axis=1)
    wmul[rows, neighbor_list] = np.broadcast_to(weight_flat, (L, NS2))
    madd[rows, neighbor_list] = 0.0
    wmul[L:, :] = 0.0
    madd[L:, :] = 0.0
    return wmul, madd


def nbfm_attention(deg_lp, ref_lp, neighbor_list, weight_flat):
    """deg_lp: (B, L, D), ref_lp: (B, L_ref, D) -> matched (B, L, D), float32."""
    B, L, D = deg_lp.shape
    Lr = ref_lp.shape[1]

    Dp = _round_up(D, 128)          # lane-dense feature axis (zero pad is a no-op for
    Lr_pad = _round_up(Lr, 128)     # norms / dots); lane-dense score & softmax axis.
    TL = _choose_tile_l(L)
    L_pad = _round_up(L, TL)

    wmul, madd = _make_score_constants(
        np.asarray(neighbor_list), np.asarray(weight_flat, np.float32), L_pad, Lr_pad)

    deg_pad = jnp.pad(deg_lp.astype(jnp.float32),
                      ((0, 0), (0, L_pad - L), (0, Dp - D)))
    ref_pad = jnp.pad(ref_lp.astype(jnp.float32),
                      ((0, 0), (0, Lr_pad - Lr), (0, Dp - D)))

    out = pl.pallas_call(
        nbfm_attn_kernel,
        out_shape=jax.ShapeDtypeStruct((B, L_pad, Dp), jnp.float32),
        grid=(B, L_pad // TL),
        in_specs=[
            pl.BlockSpec((None, TL, Dp), lambda b, l: (b, l, 0)),       # degraded tile
            pl.BlockSpec((None, Lr_pad, Dp), lambda b, l: (b, 0, 0)),   # full ref matrix
            pl.BlockSpec((TL, Lr_pad), lambda b, l: (l, 0)),            # gaussian weight
            pl.BlockSpec((TL, Lr_pad), lambda b, l: (l, 0)),            # -inf window mask
        ],
        out_specs=pl.BlockSpec((None, TL, Dp), lambda b, l: (b, l, 0)),
        compiler_params=pltpu.CompilerParams(
            dimension_semantics=("parallel", "parallel")),
    )(deg_pad, ref_pad, jnp.asarray(wmul), jnp.asarray(madd))

    return out[:, :L, :D]


# ----------------------------------------------------------------------------
# Plain-JAX glue: conv, unfold, fold, AddStyle
# ----------------------------------------------------------------------------
def conv2d(x, w, b, stride=1, padding=0, groups=1):
    y = lax.conv_general_dilated(
        x, w, window_strides=(stride, stride),
        padding=[(padding, padding), (padding, padding)],
        dimension_numbers=("NCHW", "OIHW", "NCHW"),
        feature_group_count=groups)
    return y + b[None, :, None, None]


def unfold_nchw(x, k, dilation, padding, stride):
    """nn.Unfold: (B,C,H,W) -> (B, C*k*k, L), channel order (c, kh, kw)."""
    B, C, H, W = x.shape
    xp = jnp.pad(x, ((0, 0), (0, 0), (padding, padding), (padding, padding)))
    Hp, Wp = H + 2 * padding, W + 2 * padding
    out_h = (Hp - dilation * (k - 1) - 1) // stride + 1
    out_w = (Wp - dilation * (k - 1) - 1) // stride + 1
    cols = []
    for i in range(k):
        for j in range(k):
            sl = xp[:, :,
                    i * dilation:i * dilation + (out_h - 1) * stride + 1:stride,
                    j * dilation:j * dilation + (out_w - 1) * stride + 1:stride]
            cols.append(sl)  # (B, C, out_h, out_w)
    cols = jnp.stack(cols, axis=2)              # (B, C, k*k, out_h, out_w)
    return cols.reshape(B, C * k * k, out_h * out_w)


def fold_nchw(cols, output_size, k, dilation, padding, stride):
    """nn.Fold (sum of overlapping patches): (B, C*k*k, L) -> (B, C, H, W)."""
    B, CKK, L = cols.shape
    H, W = output_size
    C = CKK // (k * k)
    Hp, Wp = H + 2 * padding, W + 2 * padding
    out_h = (Hp - dilation * (k - 1) - 1) // stride + 1
    out_w = (Wp - dilation * (k - 1) - 1) // stride + 1
    cols = cols.reshape(B, C, k, k, out_h, out_w)
    canvas = jnp.zeros((B, C, Hp, Wp), dtype=cols.dtype)
    for i in range(k):
        for j in range(k):
            canvas = canvas.at[:, :,
                               i * dilation:i * dilation + (out_h - 1) * stride + 1:stride,
                               j * dilation:j * dilation + (out_w - 1) * stride + 1:stride
                               ].add(cols[:, :, i, j])
    return canvas[:, :, padding:padding + H, padding:padding + W]


def add_style(p, degraded, ref):
    B, C, H, W = degraded.shape
    # InstanceNorm2d(affine=False), eps=1e-5, biased variance
    mean = jnp.mean(ref, axis=(2, 3), keepdims=True)
    var = jnp.mean((ref - mean) ** 2, axis=(2, 3), keepdims=True)
    ref_normed = (ref - mean) / jnp.sqrt(var + 1e-5)

    style = jax.nn.relu(conv2d(jnp.concatenate([degraded, ref], axis=1),
                               p["w_shared"], p["b_shared"], padding=1))
    gamma = conv2d(style, p["w_gamma"], p["b_gamma"], padding=1)
    beta = conv2d(style, p["w_beta"], p["b_beta"], padding=1)

    d = degraded.reshape(B, C, H * W)
    mu = jnp.mean(d, axis=-1)[..., None, None]
    sigma = jnp.std(d, axis=-1, ddof=1)[..., None, None]  # torch.std: unbiased
    gamma = gamma + sigma
    beta = beta + mu
    return ref_normed * gamma + beta


# ----------------------------------------------------------------------------
# NBFM module (parameter setup + forward)
# ----------------------------------------------------------------------------
def make_neighbor_list(resolution, patch_stride, neighbor_size):
    degraded_len = resolution[0] // patch_stride
    ref_len = degraded_len + neighbor_size - 1
    nbr = np.zeros([degraded_len ** 2, neighbor_size ** 2], dtype=np.int32)
    for i in range(nbr.shape[0]):
        dx, dy = i % degraded_len, i // degraded_len
        for j in range(nbr.shape[1]):
            ddx, ddy = j % neighbor_size, j // neighbor_size
            nbr[i, j] = (dx + ddx) + (dy + ddy) * ref_len
    return nbr


def make_gaussian_weight(neighbor_size, gamma):
    X = np.linspace(0, neighbor_size - 1, neighbor_size, dtype=np.float32)
    x, y = np.meshgrid(X, X)
    mean = (neighbor_size - 1) // 2
    w = np.exp(-((x - mean) ** 2 + (y - mean) ** 2) / gamma)
    return w.reshape(-1).astype(np.float32)


def init_params(key, dim):
    def conv_init(k, out_c, in_c, kh, kw, scale=0.1):
        kw_, kb_ = jax.random.split(k)
        w = jax.random.normal(kw_, (out_c, in_c, kh, kw), jnp.float32) * scale
        b = jax.random.normal(kb_, (out_c,), jnp.float32) * scale
        return w, b

    keys = jax.random.split(key, 6)

    def addstyle_params(k1):
        ws, bs = conv_init(k1, dim, 2 * dim, 3, 3)
        return {
            "w_shared": ws, "b_shared": bs,
            # faithful to AddStyle.__init__: gamma/beta convs are zero-initialized
            "w_gamma": jnp.zeros((dim, dim, 3, 3), jnp.float32),
            "b_gamma": jnp.zeros((dim,), jnp.float32),
            "w_beta": jnp.zeros((dim, dim, 3, 3), jnp.float32),
            "b_beta": jnp.zeros((dim,), jnp.float32),
        }

    w1, b1 = conv_init(keys[2], dim, 2 * dim, 1, 1)
    w2, b2 = conv_init(keys[3], dim, 1, 3, 3)  # depthwise (groups=dim)
    return {
        "addstyle_before": addstyle_params(keys[0]),
        "addstyle_after": addstyle_params(keys[1]),
        "fusion_w1": w1, "fusion_b1": b1,
        "fusion_w2": w2, "fusion_b2": b2,
    }


def nbfm_forward(params, degraded, ref, cfg):
    dim = cfg["dim"]
    H, W = cfg["resolution"]
    k, dil, s, ns = (cfg["patch_size"], cfg["patch_dilation"],
                     cfg["patch_stride"], cfg["neighbor_size"])
    pad_deg = (k + (dil - 1) * 2 - 1) // 2
    pad_ref = pad_deg + (ns - 1) // 2 * s

    ref = add_style(params["addstyle_before"], degraded, ref)

    deg_p = unfold_nchw(degraded, k, dil, pad_deg, s)   # (B, D, L)
    ref_p = unfold_nchw(ref, k, dil, pad_ref, s)        # (B, D, L_ref)

    deg_lp = jnp.transpose(deg_p, (0, 2, 1))            # (B, L, D)
    ref_lp = jnp.transpose(ref_p, (0, 2, 1))            # (B, L_ref, D)

    # Single Pallas kernel: normalize, neighbor-masked similarity (MXU), softmax,
    # weighted aggregation (MXU). No (B, L, NS2, D) gather is ever materialized.
    matched_lp = nbfm_attention(deg_lp, ref_lp,
                                cfg["neighbor_list"], cfg["weight"])
    matched_p = jnp.transpose(matched_lp, (0, 2, 1))     # (B, D, L)
    matched = fold_nchw(matched_p, (H, W), k, dil, pad_deg, s)

    matched = add_style(params["addstyle_after"], degraded, matched)

    x = jnp.concatenate([degraded, matched], axis=1)
    x = conv2d(x, params["fusion_w1"], params["fusion_b1"], padding=0)
    x = conv2d(x, params["fusion_w2"], params["fusion_b2"], padding=1, groups=dim)
    return jax.nn.relu(x)


# ----------------------------------------------------------------------------
if __name__ == "__main__":
    cfg = {
        "dim": 4,
        "resolution": (16, 16),
        "patch_size": 3,
        "patch_dilation": 1,
        "patch_stride": 2,
        "neighbor_size": 3,
        "gamma": 6,
    }
    cfg["neighbor_list"] = make_neighbor_list(
        cfg["resolution"], cfg["patch_stride"], cfg["neighbor_size"])       # np.int32
    cfg["weight"] = make_gaussian_weight(cfg["neighbor_size"], cfg["gamma"])  # np.float32

    key = jax.random.PRNGKey(0)
    kp, kd, kr = jax.random.split(key, 3)
    params = init_params(kp, cfg["dim"])

    B = 2
    degraded = jax.random.normal(kd, (B, cfg["dim"], 16, 16), jnp.float32)
    ref = jax.random.normal(kr, (B, cfg["dim"], 16, 16), jnp.float32)

    fwd = jax.jit(lambda p, d, r: nbfm_forward(p, d, r, cfg))
    out = fwd(params, degraded, ref)
    jax.block_until_ready(out)
    assert out.shape == (B, cfg["dim"], 16, 16)
    assert jnp.all(jnp.isfinite(out))
    print("KERNEL_OK")
</pallas_src>

<mosaic_0001>
module attributes {stable_mosaic.version = 11 : i64} {
  func.func @nbfm_attn_kernel(%arg0: i32, %arg1: i32, %arg2: memref<1x64x128xf32, #tpu.memory_space<vmem>>, %arg3: memref<1x128x128xf32, #tpu.memory_space<vmem>>, %arg4: memref<64x128xf32, #tpu.memory_space<vmem>>, %arg5: memref<64x128xf32, #tpu.memory_space<vmem>>, %arg6: memref<1x64x128xf32, #tpu.memory_space<vmem>>) attributes {dimension_semantics = [#tpu.dimension_semantics<parallel>, #tpu.dimension_semantics<parallel>], iteration_bounds = array<i64: 2, 1>, scalar_prefetch = 0 : i64, scratch_operands = 0 : i64, tpu.core_type = #tpu.core_type<tc>, window_params = [{transform_indices = @transform_0, window_bounds = array<i64: 1, 64, 128>}, {transform_indices = @transform_1, window_bounds = array<i64: 1, 128, 128>}, {transform_indices = @transform_2, window_bounds = array<i64: 64, 128>}, {transform_indices = @transform_3, window_bounds = array<i64: 64, 128>}, {transform_indices = @transform_4, window_bounds = array<i64: 1, 64, 128>}]} {
    %c0 = arith.constant 0 : index
    %c0_0 = arith.constant 0 : index
    %c0_1 = arith.constant 0 : index
    %0 = vector.load %arg2[%c0, %c0_0, %c0_1] : memref<1x64x128xf32, #tpu.memory_space<vmem>>, vector<1x64x128xf32>
    %1 = vector.shape_cast %0 : vector<1x64x128xf32> to vector<64x128xf32>
    %c0_2 = arith.constant 0 : index
    %c0_3 = arith.constant 0 : index
    %c0_4 = arith.constant 0 : index
    %2 = vector.load %arg3[%c0_2, %c0_3, %c0_4] : memref<1x128x128xf32, #tpu.memory_space<vmem>>, vector<1x128x128xf32>
    %3 = vector.shape_cast %2 : vector<1x128x128xf32> to vector<128x128xf32>
    %4 = arith.mulf %1, %1 : vector<64x128xf32>
    %cst = arith.constant dense<0.000000e+00> : vector<64xf32>
    %5 = vector.multi_reduction <add>, %4, %cst [1] : vector<64x128xf32> to vector<64xf32>
    %6 = vector.shape_cast %5 : vector<64xf32> to vector<64x1xf32>
    %cst_5 = arith.constant 1.000000e-24 : f32
    %7 = vector.broadcast %cst_5 : f32 to vector<64x1xf32>
    %8 = arith.maximumf %6, %7 : vector<64x1xf32>
    %9 = math.rsqrt %8 : vector<64x1xf32>
    %10 = vector.broadcast %9 : vector<64x1xf32> to vector<64x128xf32>
    %11 = arith.mulf %1, %10 : vector<64x128xf32>
    %12 = arith.mulf %3, %3 : vector<128x128xf32>
    %cst_6 = arith.constant dense<0.000000e+00> : vector<128xf32>
    %13 = vector.multi_reduction <add>, %12, %cst_6 [1] : vector<128x128xf32> to vector<128xf32>
    %14 = vector.shape_cast %13 : vector<128xf32> to vector<128x1xf32>
    %cst_7 = arith.constant 1.000000e-24 : f32
    %15 = vector.broadcast %cst_7 : f32 to vector<128x1xf32>
    %16 = arith.maximumf %14, %15 : vector<128x1xf32>
    %17 = math.rsqrt %16 : vector<128x1xf32>
    %18 = vector.broadcast %17 : vector<128x1xf32> to vector<128x128xf32>
    %19 = arith.mulf %3, %18 : vector<128x128xf32>
    %20 = tpu.transpose %19, [1, 0] : vector<128x128xf32> -> vector<128x128xf32>
    %cst_8 = arith.constant dense<0.000000e+00> : vector<64x128xf32>
    %21 = tpu.matmul %11, %20, %cst_8 {dimension_numbers = #tpu.dot_dimension_numbers<[1], [0], [0], [1], [0, 0, 1, 1], [], []>} : vector<64x128xf32>, vector<128x128xf32>, vector<64x128xf32> -> vector<64x128xf32>
    %c0_9 = arith.constant 0 : index
    %c0_10 = arith.constant 0 : index
    %22 = vector.load %arg4[%c0_9, %c0_10] : memref<64x128xf32, #tpu.memory_space<vmem>>, vector<64x128xf32>
    %23 = arith.mulf %21, %22 : vector<64x128xf32>
    %c0_11 = arith.constant 0 : index
    %c0_12 = arith.constant 0 : index
    %24 = vector.load %arg5[%c0_11, %c0_12] : memref<64x128xf32, #tpu.memory_space<vmem>>, vector<64x128xf32>
    %25 = arith.addf %23, %24 : vector<64x128xf32>
    %cst_13 = arith.constant dense<0xFF800000> : vector<64xf32>
    %26 = vector.multi_reduction <maximumf>, %25, %cst_13 [1] : vector<64x128xf32> to vector<64xf32>
    %27 = vector.shape_cast %26 : vector<64xf32> to vector<64x1xf32>
    %28 = vector.broadcast %27 : vector<64x1xf32> to vector<64x128xf32>
    %29 = arith.subf %25, %28 : vector<64x128xf32>
    %30 = math.exp %29 : vector<64x128xf32>
    %cst_14 = arith.constant dense<0.000000e+00> : vector<64xf32>
    %31 = vector.multi_reduction <add>, %30, %cst_14 [1] : vector<64x128xf32> to vector<64xf32>
    %32 = vector.shape_cast %31 : vector<64xf32> to vector<64x1xf32>
    %33 = tpu.reciprocal %32 {approx = true} : vector<64x1xf32> -> vector<64x1xf32>
    %34 = vector.broadcast %33 : vector<64x1xf32> to vector<64x128xf32>
    %35 = arith.mulf %30, %34 : vector<64x128xf32>
    %cst_15 = arith.constant dense<0.000000e+00> : vector<64x128xf32>
    %36 = tpu.matmul %35, %19, %cst_15 {dimension_numbers = #tpu.dot_dimension_numbers<[1], [0], [0], [1], [0, 0, 1, 1], [], []>} : vector<64x128xf32>, vector<128x128xf32>, vector<64x128xf32> -> vector<64x128xf32>
    %c0_16 = arith.constant 0 : index
    %c0_17 = arith.constant 0 : index
    %c0_18 = arith.constant 0 : index
    %37 = vector.load %arg6[%c0_16, %c0_17, %c0_18] : memref<1x64x128xf32, #tpu.memory_space<vmem>>, vector<1x64x128xf32>
    %38 = vector.shape_cast %37 : vector<1x64x128xf32> to vector<64x128xf32>
    %39 = vector.shape_cast %36 : vector<64x128xf32> to vector<1x64x128xf32>
    tpu.vector_store %arg6[%c0_16, %c0_17, %c0_18], %39 {strides = array<i32>} : memref<1x64x128xf32, #tpu.memory_space<vmem>>, vector<1x64x128xf32>,
    return
  }
  func.func @transform_0(%arg0: i32, %arg1: i32) -> (i32, i32, i32) {
    %c0_i32 = arith.constant 0 : i32
    %c0_i32_0 = arith.constant 0 : i32
    return %arg0, %arg1, %c0_i32 : i32, i32, i32
  }
  func.func @transform_1(%arg0: i32, %arg1: i32) -> (i32, i32, i32) {
    %c0_i32 = arith.constant 0 : i32
    %c0_i32_0 = arith.constant 0 : i32
    %c0_i32_1 = arith.constant 0 : i32
    return %arg0, %c0_i32, %c0_i32_0 : i32, i32, i32
  }
  func.func @transform_2(%arg0: i32, %arg1: i32) -> (i32, i32) {
    %c0_i32 = arith.constant 0 : i32
    %c0_i32_0 = arith.constant 0 : i32
    return %arg1, %c0_i32 : i32, i32
  }
  func.func @transform_3(%arg0: i32, %arg1: i32) -> (i32, i32) {
    %c0_i32 = arith.constant 0 : i32
    %c0_i32_0 = arith.constant 0 : i32
    return %arg1, %c0_i32 : i32, i32
  }
  func.func @transform_4(%arg0: i32, %arg1: i32) -> (i32, i32, i32) {
    %c0_i32 = arith.constant 0 : i32
    %c0_i32_0 = arith.constant 0 : i32
    return %arg0, %arg1, %c0_i32 : i32, i32, i32
  }
}

</mosaic_0001>

<llo_original>
// kernel: _lambda_.1
$region0: #{_lambda_.1}
  #allocation0 [shape = 'u32[]', space=smem, size = 0x4, offset = 0x4, fixed_abs, tag = 'smem constant byte address 0x4 - core index']
  #allocation1 [shape = 'u32[144,128]{1,0:T(1,128)}', space=vmem, size = 0x12000, scoped, tag = 'internal scratch']
  %s0 = inlined_call_operand.vmem [shape: f32[2,64,128], index: 0, kind: input, shape index: {}]
  %s1 = inlined_call_operand.vmem [shape: f32[2,128,128], index: 1, kind: input, shape index: {}]
  %s2 = inlined_call_operand.vmem [shape: f32[64,128], index: 2, kind: input, shape index: {}]
  %s3 = inlined_call_operand.vmem [shape: f32[64,128], index: 3, kind: input, shape index: {}]
  %s4 = inlined_call_operand.vmem [shape: f32[2,64,128], index: 4, kind: output, shape index: {}]
  %s5 = sld [smem:[#allocation0]]
  $region49: #{_lambda_.1} parent=0
    _
  %s7 = ssub.s32 1, %s5
  %s8 = scalar_select 0, %s7, %s5
  loop: start=0, step=1, limit=4
  $region2: #{_lambda_.1} parent=0 // loop_pre_header
    _
  $region3: #{_lambda_.1} parent=0 // loop_header
    %s10 = sphi 0, %s14
    %p11 = scmp.ge.s32.totalorder %s10, 4
    %s17 = sphi 0, %s29
    %s18 = sphi 0, %s25
    %s19 = sphi 0, %s17
    %s20 = sphi 0, %s18
    %s21 = sphi 0, %s19
    %s22 = sphi 0, %s20
    %s34 = sphi 0, %s36
    %s37 = sphi 0, %s34
    %s38 = sphi 0, %s37
    %s54 = sphi 0, %s38
    %s60 = sphi 0, %s62
    %s63 = sphi 0, %s60
    %s64 = sphi 0, %s63
    %s80 = sphi 0, %s64
    %s86 = sphi 0, %s88
    %s89 = sphi 0, %s86
    %s90 = sphi 0, %s89
    %s106 = sphi 0, %s90
    %s112 = sphi 0, %s114
    %s115 = sphi 0, %s112
    %s116 = sphi 0, %s115
    %s132 = sphi 0, %s116
    %s140 = sphi 0, %s142
    %s143 = sphi 0, %s140
    %s144 = sphi 0, %s143
    %s160 = sphi 0, %s144
  $region4: #{_lambda_.1} parent=0 // loop_header_branch
    %13 = sbr.rel (%p11) target = $region8
  $region5: #{_lambda_.1} parent=0 // loop_body
    %s15 = ssub.s32 %s10, 1
    %s16 = ssub.s32 %s10, 2
    %s23 = sadd.s32 1, %s18
    %p24 = scmp.ge.s32.totalorder %s23, 1
    %s25 = scalar_select %p24, 0, %s23
    %s26 = sadd.s32 1, %s17
    %s27 = scalar_select %p24, %s26, %s17
    %p28 = scmp.ge.s32.totalorder %s27, 2
    %s29 = scalar_select %p28, 0, %s27
    %s30 = ssub.s32 %s17, %s29
    %s31 = ssub.s32 %s18, %s25
    %s32 = sor.u32 %s30, %s31
    %p33 = scmp.eq.s32.totalorder %s32, 0
    %s35 = sadd.s32 %s34, 1
    %s36 = scalar_select %p33, %s34, %s35
    %p39 = pneg %p33
    %p40 = scmp.eq.s32.totalorder %s10, 1
    %p41 = por %p39, %p40
    %p42 = scmp.ne.s32.totalorder %s34, %s37
    %p43 = scmp.eq.s32.totalorder %s10, 0
    %p44 = por %p42, %p43
    %p45 = scmp.ne.s32.totalorder %s34, %s37
    %p46 = scmp.eq.s32.totalorder %s15, 1
    %p47 = por %p45, %p46
    %p48 = scmp.ne.s32.totalorder %s37, %s38
    %p49 = scmp.eq.s32.totalorder %s15, 0
    %p50 = por %p48, %p49
    %p51 = scmp.ne.s32.totalorder %s37, %s38
    %p52 = scmp.eq.s32.totalorder %s16, 1
    %p53 = por %p51, %p52
    %p55 = scmp.ne.s32.totalorder %s38, %s54
    %p56 = scmp.eq.s32.totalorder %s16, 0
    %p57 = por %p55, %p56
    %s58 = ssub.s32 %s17, %s29
    %p59 = scmp.eq.s32.totalorder %s58, 0
    %s61 = sadd.s32 %s60, 1
    %s62 = scalar_select %p59, %s60, %s61
    %p65 = pneg %p59
    %p66 = scmp.eq.s32.totalorder %s10, 1
    %p67 = por %p65, %p66
    %p68 = scmp.ne.s32.totalorder %s60, %s63
    %p69 = scmp.eq.s32.totalorder %s10, 0
    %p70 = por %p68, %p69
    %p71 = scmp.ne.s32.totalorder %s60, %s63
    %p72 = scmp.eq.s32.totalorder %s15, 1
    %p73 = por %p71, %p72
    %p74 = scmp.ne.s32.totalorder %s63, %s64
    %p75 = scmp.eq.s32.totalorder %s15, 0
    %p76 = por %p74, %p75
    %p77 = scmp.ne.s32.totalorder %s63, %s64
    %p78 = scmp.eq.s32.totalorder %s16, 1
    %p79 = por %p77, %p78
    %p81 = scmp.ne.s32.totalorder %s64, %s80
    %p82 = scmp.eq.s32.totalorder %s16, 0
    %p83 = por %p81, %p82
    %s84 = ssub.s32 %s18, %s25
    %p85 = scmp.eq.s32.totalorder %s84, 0
    %s87 = sadd.s32 %s86, 1
    %s88 = scalar_select %p85, %s86, %s87
    %p91 = pneg %p85
    %p92 = scmp.eq.s32.totalorder %s10, 1
    %p93 = por %p91, %p92
    %p94 = scmp.ne.s32.totalorder %s86, %s89
    %p95 = scmp.eq.s32.totalorder %s10, 0
    %p96 = por %p94, %p95
    %p97 = scmp.ne.s32.totalorder %s86, %s89
    %p98 = scmp.eq.s32.totalorder %s15, 1
    %p99 = por %p97, %p98
    %p100 = scmp.ne.s32.totalorder %s89, %s90
    %p101 = scmp.eq.s32.totalorder %s15, 0
    %p102 = por %p100, %p101
    %p103 = scmp.ne.s32.totalorder %s89, %s90
    %p104 = scmp.eq.s32.totalorder %s16, 1
    %p105 = por %p103, %p104
    %p107 = scmp.ne.s32.totalorder %s90, %s106
    %p108 = scmp.eq.s32.totalorder %s16, 0
    %p109 = por %p107, %p108
    %s110 = ssub.s32 %s18, %s25
    %p111 = scmp.eq.s32.totalorder %s110, 0
    %s113 = sadd.s32 %s112, 1
    %s114 = scalar_select %p111, %s112, %s113
    %p117 = pneg %p111
    %p118 = scmp.eq.s32.totalorder %s10, 1
    %p119 = por %p117, %p118
    %p120 = scmp.ne.s32.totalorder %s112, %s115
    %p121 = scmp.eq.s32.totalorder %s10, 0
    %p122 = por %p120, %p121
    %p123 = scmp.ne.s32.totalorder %s112, %s115
    %p124 = scmp.eq.s32.totalorder %s15, 1
    %p125 = por %p123, %p124
    %p126 = scmp.ne.s32.totalorder %s115, %s116
    %p127 = scmp.eq.s32.totalorder %s15, 0
    %p128 = por %p126, %p127
    %p129 = scmp.ne.s32.totalorder %s115, %s116
    %p130 = scmp.eq.s32.totalorder %s16, 1
    %p131 = por %p129, %p130
    %p133 = scmp.ne.s32.totalorder %s116, %s132
    %p134 = scmp.eq.s32.totalorder %s16, 0
    %p135 = por %p133, %p134
    %s136 = ssub.s32 %s17, %s29
    %s137 = ssub.s32 %s18, %s25
    %s138 = sor.u32 %s136, %s137
    %p139 = scmp.eq.s32.totalorder %s138, 0
    %s141 = sadd.s32 %s140, 1
    %s142 = scalar_select %p139, %s140, %s141
    %p145 = pneg %p139
    %p146 = scmp.eq.s32.totalorder %s10, 1
    %p147 = por %p145, %p146
    %p148 = scmp.ne.s32.totalorder %s140, %s143
    %p149 = scmp.eq.s32.totalorder %s10, 0
    %p150 = por %p148, %p149
    %p151 = scmp.ne.s32.totalorder %s140, %s143
    %p152 = scmp.eq.s32.totalorder %s15, 1
    %p153 = por %p151, %p152
    %p154 = scmp.ne.s32.totalorder %s143, %s144
    %p155 = scmp.eq.s32.totalorder %s15, 0
    %p156 = por %p154, %p155
    %p157 = scmp.ne.s32.totalorder %s143, %s144
    %p158 = scmp.eq.s32.totalorder %s16, 1
    %p159 = por %p157, %p158
    %p161 = scmp.ne.s32.totalorder %s144, %s160
    %p162 = scmp.eq.s32.totalorder %s16, 0
    %p163 = por %p161, %p162
    %p164 = scmp.le.s32.totalorder 1, %s10
    %p165 = scmp.lt.s32.totalorder %s10, 3
    %p166 = pnand %p164, %p165
    %p167 = pneg %p166
    // Predicated region
    $region9: #{_lambda_.1} parent=5 // pred_check
      _
    $region10: #{_lambda_.1} parent=5 // pred_check_branch
      %169 = sbr.rel (%p166) target = $region12
    $region11: #{_lambda_.1} parent=5 // pred_region
      %s170 = ssub.s32 %s10, 1
      // Predicated region
      $region13: #{_lambda_.1} parent=11 // pred_check
        %p171 = pneg %p102
      $region14: #{_lambda_.1} parent=11 // pred_check_branch
        %173 = sbr.rel (%p171) target = $region16
      $region15: #{_lambda_.1} parent=11 // pred_region
        %s174 = smul.u32 8, %s20
        %p175 = scmp.lt.s32.totalorder %s174, 7
        %s176 = scalar_select %p175, %s174, 7
        %s177 = smul.addr %s176, 8
        %s178 = scalar_lea.vmem %s2, %s177
        %s179 = smul.u32 8, %s20
      $region16: #{_lambda_.1} parent=11 // pred_fallthru
        _
      // Predicated region
      $region17: #{_lambda_.1} parent=11 // pred_check
        %p180 = pneg %p128
      $region18: #{_lambda_.1} parent=11 // pred_check_branch
        %182 = sbr.rel (%p180) target = $region20
      $region19: #{_lambda_.1} parent=11 // pred_region
        %s183 = smul.u32 8, %s20
        %p184 = scmp.lt.s32.totalorder %s183, 7
        %s185 = scalar_select %p184, %s183, 7
        %s186 = smul.addr %s185, 8
        %s187 = scalar_lea.vmem %s3, %s186
        %s188 = smul.u32 8, %s20
      $region20: #{_lambda_.1} parent=11 // pred_fallthru
        _
    $region12: #{_lambda_.1} parent=5 // pred_fallthru
      _
    %p189 = scmp.lt.s32.totalorder %s10, 2
    // Predicated region
    $region21: #{_lambda_.1} parent=5 // pred_check
      %p190 = pneg %p189
    $region22: #{_lambda_.1} parent=5 // pred_check_branch
      %192 = sbr.rel (%p190) target = $region24
    $region23: #{_lambda_.1} parent=5 // pred_region
      // Predicated region
      $region25: #{_lambda_.1} parent=23 // pred_check
        %p193 = pneg %p44
      $region26: #{_lambda_.1} parent=23 // pred_check_branch
        %195 = sbr.rel (%p193) target = $region28
      $region27: #{_lambda_.1} parent=23 // pred_region
        %s196 = smul.u32 8, %s18
        %p197 = scmp.lt.s32.totalorder %s17, 1
        %s198 = scalar_select %p197, %s17, 1
        %p199 = scmp.lt.s32.totalorder %s196, 7
        %s200 = scalar_select %p199, %s196, 7
        %s201 = smul.addr %s198, 8
        %s202 = sadd.s32 %s200, %s201
        %s203 = smul.addr %s202, 8
        %s204 = scalar_lea.vmem %s0, %s203
        %s205 = smul.u32 8, %s18
      $region28: #{_lambda_.1} parent=23 // pred_fallthru
        _
      // Predicated region
      $region29: #{_lambda_.1} parent=23 // pred_check
        %p206 = pneg %p70
      $region30: #{_lambda_.1} parent=23 // pred_check_branch
        %208 = sbr.rel (%p206) target = $region32
      $region31: #{_lambda_.1} parent=23 // pred_region
        %p209 = scmp.lt.s32.totalorder %s17, 1
        %s210 = scalar_select %p209, %s17, 1
        %s211 = smul.addr %s210, 16
        %s212 = smul.addr %s211, 8
        %s213 = scalar_lea.vmem %s1, %s212
      $region32: #{_lambda_.1} parent=23 // pred_fallthru
        _
    $region24: #{_lambda_.1} parent=5 // pred_fallthru
      _
    %p214 = scmp.le.s32.totalorder 1, %s10
    %p215 = scmp.lt.s32.totalorder %s10, 3
    %p216 = pnand %p214, %p215
    %p217 = pneg %p216
    // Predicated region
    $region33: #{_lambda_.1} parent=5 // pred_check
      _
    $region34: #{_lambda_.1} parent=5 // pred_check_branch
      %219 = sbr.rel (%p216) target = $region36
    $region35: #{_lambda_.1} parent=5 // pred_region
      %s220 = ssub.s32 %s10, 1
      %s221 = smul.u32 8, %s20
      %p222 = scmp.lt.s32.totalorder %s19, 1
      %s223 = scalar_select %p222, %s19, 1
      %p224 = scmp.lt.s32.totalorder %s221, 7
      %s225 = scalar_select %p224, %s221, 7
      %s226 = smul.addr %s223, 8
      %s227 = sadd.s32 %s225, %s226
      %s228 = smul.addr %s227, 8
      %s229 = scalar_lea.vmem %s0, %s228
      %p230 = pneg %p50
      %p231 = pneg %p47
      %p232 = scmp.lt.s32.totalorder %s19, 1
      %s233 = scalar_select %p232, %s19, 1
      %s234 = smul.addr %s233, 16
      %s235 = smul.addr %s234, 8
      %s236 = scalar_lea.vmem %s1, %s235
      %p237 = pneg %p76
      %p238 = pneg %p73
      %s239 = smul.u32 8, %s20
      %p240 = scmp.lt.s32.totalorder %s239, 7
      %s241 = scalar_select %p240, %s239, 7
      %s242 = smul.addr %s241, 8
      %s243 = scalar_lea.vmem %s2, %s242
      %p244 = pneg %p102
      %p245 = pneg %p99
      %s246 = smul.u32 8, %s20
      %p247 = scmp.lt.s32.totalorder %s246, 7
      %s248 = scalar_select %p247, %s246, 7
      %s249 = smul.addr %s248, 8
      %s250 = scalar_lea.vmem %s3, %s249
      %p251 = pneg %p128
      %p252 = pneg %p125
      %p253 = pneg %p156
      %p254 = pneg %p153
      %s255 = smul.u32 8, %s20
      %p256 = scmp.lt.s32.totalorder %s19, 1
      %s257 = scalar_select %p256, %s19, 1
      %p258 = scmp.lt.s32.totalorder %s255, 7
      %s259 = scalar_select %p258, %s255, 7
      %s260 = smul.addr %s257, 8
      %s261 = sadd.s32 %s259, %s260
      %s262 = smul.addr %s261, 8
      %s263 = scalar_lea.vmem %s4, %s262
      %s264 = smul.u32 8, %s20
      %p265 = scmp.lt.s32.totalorder %s19, 1
      %s266 = scalar_select %p265, %s19, 1
      %p267 = scmp.lt.s32.totalorder %s264, 7
      %s268 = scalar_select %p267, %s264, 7
      %s269 = smul.addr %s266, 8
      %s270 = sadd.s32 %s268, %s269
      %s271 = smul.addr %s270, 8
      %s272 = scalar_lea.vmem %s0, %s271
      %s273 = smul.u32 8, %s20
      %p274 = scmp.lt.s32.totalorder %s19, 1
      %s275 = scalar_select %p274, %s19, 1
      %s276 = smul.addr %s275, 16
      %s277 = smul.addr %s276, 8
      %s278 = scalar_lea.vmem %s1, %s277
      %s279 = smul.u32 8, %s20
      %p280 = scmp.lt.s32.totalorder %s279, 7
      %s281 = scalar_select %p280, %s279, 7
      %s282 = smul.addr %s281, 8
      %s283 = scalar_lea.vmem %s2, %s282
      %s284 = smul.u32 8, %s20
      %s285 = smul.u32 8, %s20
      %p286 = scmp.lt.s32.totalorder %s285, 7
      %s287 = scalar_select %p286, %s285, 7
      %s288 = smul.addr %s287, 8
      %s289 = scalar_lea.vmem %s3, %s288
      %s290 = smul.u32 8, %s20
      %s291 = smul.u32 8, %s20
      %p292 = scmp.lt.s32.totalorder %s19, 1
      %s293 = scalar_select %p292, %s19, 1
      %p294 = scmp.lt.s32.totalorder %s291, 7
      %s295 = scalar_select %p294, %s291, 7
      %s296 = smul.addr %s293, 8
      %s297 = sadd.s32 %s295, %s296
      %s298 = smul.addr %s297, 8
      %s299 = scalar_lea.vmem %s4, %s298
      %s300 = smul.u32 8, %s20
      %v301 = vld [vmem:[%s272] sm:$0xff]
      %v302 = vld [vmem:[%s272 + $0x8] sm:$0xff]
      %v303 = vld [vmem:[%s272 + $0x10] sm:$0xff]
      %v304 = vld [vmem:[%s272 + $0x18] sm:$0xff]
      %v305 = vld [vmem:[%s272 + $0x20] sm:$0xff]
      %v306 = vld [vmem:[%s272 + $0x28] sm:$0xff]
      %v307 = vld [vmem:[%s272 + $0x30] sm:$0xff]
      %v308 = vld [vmem:[%s272 + $0x38] sm:$0xff]
      %v309 = vld [vmem:[%s278] sm:$0xff]
      %v310 = vld [vmem:[%s278 + $0x8] sm:$0xff]
      %v311 = vld [vmem:[%s278 + $0x10] sm:$0xff]
      %v312 = vld [vmem:[%s278 + $0x18] sm:$0xff]
      %v313 = vld [vmem:[%s278 + $0x20] sm:$0xff]
      %v314 = vld [vmem:[%s278 + $0x28] sm:$0xff]
      %v315 = vld [vmem:[%s278 + $0x30] sm:$0xff]
      %v316 = vld [vmem:[%s278 + $0x38] sm:$0xff]
      %v317 = vld [vmem:[%s278 + $0x40] sm:$0xff]
      %v318 = vld [vmem:[%s278 + $0x48] sm:$0xff]
      %v319 = vld [vmem:[%s278 + $0x50] sm:$0xff]
      %v320 = vld [vmem:[%s278 + $0x58] sm:$0xff]
      %v321 = vld [vmem:[%s278 + $0x60] sm:$0xff]
      %v322 = vld [vmem:[%s278 + $0x68] sm:$0xff]
      %v323 = vld [vmem:[%s278 + $0x70] sm:$0xff]
      %v324 = vld [vmem:[%s278 + $0x78] sm:$0xff]
      %v325 = vmul.f32 %v301, %v301
      %v326 = vmul.f32 %v302, %v302
      %v327 = vmul.f32 %v303, %v303
      %v328 = vmul.f32 %v304, %v304
      %v329 = vmul.f32 %v305, %v305
      %v330 = vmul.f32 %v306, %v306
      %v331 = vmul.f32 %v307, %v307
      %v332 = vmul.f32 %v308, %v308
      %333 = vadd.xlane.f32.xlu0 %v325
      %v334 = vpop.xlane.xlu0 %333
      %335 = vadd.xlane.f32.xlu0 %v326
      %v336 = vpop.xlane.xlu0 %335
      %337 = vadd.xlane.f32.xlu0 %v327
      %v338 = vpop.xlane.xlu0 %337
      %339 = vadd.xlane.f32.xlu0 %v328
      %v340 = vpop.xlane.xlu0 %339
      %341 = vadd.xlane.f32.xlu0 %v329
      %v342 = vpop.xlane.xlu0 %341
      %343 = vadd.xlane.f32.xlu0 %v330
      %v344 = vpop.xlane.xlu0 %343
      %345 = vadd.xlane.f32.xlu0 %v331
      %v346 = vpop.xlane.xlu0 %345
      %347 = vadd.xlane.f32.xlu0 %v332
      %v348 = vpop.xlane.xlu0 %347
      %v349 = vmax.f32 %v334, 1e-24
      %v350 = vmax.f32 %v336, 1e-24
      %v351 = vmax.f32 %v338, 1e-24
      %v352 = vmax.f32 %v340, 1e-24
      %v353 = vmax.f32 %v342, 1e-24
      %v354 = vmax.f32 %v344, 1e-24
      %v355 = vmax.f32 %v346, 1e-24
      %v356 = vmax.f32 %v348, 1e-24
      %v357 = vrsqrt.pop %v349
      %v358 = vrsqrt.pop %v350
      %v359 = vrsqrt.pop %v351
      %v360 = vrsqrt.pop %v352
      %v361 = vrsqrt.pop %v353
      %v362 = vrsqrt.pop %v354
      %v363 = vrsqrt.pop %v355
      %v364 = vrsqrt.pop %v356
      %v365 = vmul.f32 %v301, %v357
      %v366 = vmul.f32 %v302, %v358
      %v367 = vmul.f32 %v303, %v359
      %v368 = vmul.f32 %v304, %v360
      %v369 = vmul.f32 %v305, %v361
      %v370 = vmul.f32 %v306, %v362
      %v371 = vmul.f32 %v307, %v363
      %v372 = vmul.f32 %v308, %v364
      %v373 = vmul.f32 %v309, %v309
      %v374 = vmul.f32 %v310, %v310
      %v375 = vmul.f32 %v311, %v311
      %v376 = vmul.f32 %v312, %v312
      %v377 = vmul.f32 %v313, %v313
      %v378 = vmul.f32 %v314, %v314
      %v379 = vmul.f32 %v315, %v315
      %v380 = vmul.f32 %v316, %v316
      %v381 = vmul.f32 %v317, %v317
      %v382 = vmul.f32 %v318, %v318
      %v383 = vmul.f32 %v319, %v319
      %v384 = vmul.f32 %v320, %v320
      %v385 = vmul.f32 %v321, %v321
      %v386 = vmul.f32 %v322, %v322
      %v387 = vmul.f32 %v323, %v323
      %v388 = vmul.f32 %v324, %v324
      %389 = vadd.xlane.f32.xlu0 %v373
      %v390 = vpop.xlane.xlu0 %389
      %391 = vadd.xlane.f32.xlu0 %v374
      %v392 = vpop.xlane.xlu0 %391
      %393 = vadd.xlane.f32.xlu0 %v375
      %v394 = vpop.xlane.xlu0 %393
      %395 = vadd.xlane.f32.xlu0 %v376
      %v396 = vpop.xlane.xlu0 %395
      %397 = vadd.xlane.f32.xlu0 %v377
      %v398 = vpop.xlane.xlu0 %397
      %399 = vadd.xlane.f32.xlu0 %v378
      %v400 = vpop.xlane.xlu0 %399
      %401 = vadd.xlane.f32.xlu0 %v379
      %v402 = vpop.xlane.xlu0 %401
      %403 = vadd.xlane.f32.xlu0 %v380
      %v404 = vpop.xlane.xlu0 %403
      %405 = vadd.xlane.f32.xlu0 %v381
      %v406 = vpop.xlane.xlu0 %405
      %407 = vadd.xlane.f32.xlu0 %v382
      %v408 = vpop.xlane.xlu0 %407
      %409 = vadd.xlane.f32.xlu0 %v383
      %v410 = vpop.xlane.xlu0 %409
      %411 = vadd.xlane.f32.xlu0 %v384
      %v412 = vpop.xlane.xlu0 %411
      %413 = vadd.xlane.f32.xlu0 %v385
      %v414 = vpop.xlane.xlu0 %413
      %415 = vadd.xlane.f32.xlu0 %v386
      %v416 = vpop.xlane.xlu0 %415
      %417 = vadd.xlane.f32.xlu0 %v387
      %v418 = vpop.xlane.xlu0 %417
      %419 = vadd.xlane.f32.xlu0 %v388
      %v420 = vpop.xlane.xlu0 %419
      %v421 = vmax.f32 %v390, 1e-24
      %v422 = vmax.f32 %v392, 1e-24
      %v423 = vmax.f32 %v394, 1e-24
      %v424 = vmax.f32 %v396, 1e-24
      %v425 = vmax.f32 %v398, 1e-24
      %v426 = vmax.f32 %v400, 1e-24
      %v427 = vmax.f32 %v402, 1e-24
      %v428 = vmax.f32 %v404, 1e-24
      %v429 = vmax.f32 %v406, 1e-24
      %v430 = vmax.f32 %v408, 1e-24
      %v431 = vmax.f32 %v410, 1e-24
      %v432 = vmax.f32 %v412, 1e-24
      %v433 = vmax.f32 %v414, 1e-24
      %v434 = vmax.f32 %v416, 1e-24
      %v435 = vmax.f32 %v418, 1e-24
      %v436 = vmax.f32 %v420, 1e-24
      %v437 = vrsqrt.pop %v421
      %v438 = vrsqrt.pop %v422
      %v439 = vrsqrt.pop %v423
      %v440 = vrsqrt.pop %v424
      %v441 = vrsqrt.pop %v425
      %v442 = vrsqrt.pop %v426
      %v443 = vrsqrt.pop %v427
      %v444 = vrsqrt.pop %v428
      %v445 = vrsqrt.pop %v429
      %v446 = vrsqrt.pop %v430
      %v447 = vrsqrt.pop %v431
      %v448 = vrsqrt.pop %v432
      %v449 = vrsqrt.pop %v433
      %v450 = vrsqrt.pop %v434
      %v451 = vrsqrt.pop %v435
      %v452 = vrsqrt.pop %v436
      %v453 = vmul.f32 %v309, %v437
      %v454 = vmul.f32 %v310, %v438
      %v455 = vmul.f32 %v311, %v439
      %v456 = vmul.f32 %v312, %v440
      %v457 = vmul.f32 %v313, %v441
      %v458 = vmul.f32 %v314, %v442
      %v459 = vmul.f32 %v315, %v443
      %v460 = vmul.f32 %v316, %v444
      %v461 = vmul.f32 %v317, %v445
      %v462 = vmul.f32 %v318, %v446
      %v463 = vmul.f32 %v319, %v447
      %v464 = vmul.f32 %v320, %v448
      %v465 = vmul.f32 %v321, %v449
      %v466 = vmul.f32 %v322, %v450
      %v467 = vmul.f32 %v323, %v451
      %v468 = vmul.f32 %v324, %v452
      %469 = vmatprep.subr.mxu0 0.0
      %470 = vmatpush1.xpose.msra.mxu0 %v453
      %471 = vmatprep.subr.mxu0 0.0
      %472 = vmatpush1.xpose.msra.mxu0 %v454
      %473 = vmatprep.subr.mxu0 0.0
      %474 = vmatpush1.xpose.msra.mxu0 %v455
      %475 = vmatprep.subr.mxu0 0.0
      %476 = vmatpush1.xpose.msra.mxu0 %v456
      %477 = vmatprep.subr.mxu0 0.0
      %478 = vmatpush1.xpose.msra.mxu0 %v457
      %479 = vmatprep.subr.mxu0 0.0
      %480 = vmatpush1.xpose.msra.mxu0 %v458
      %481 = vmatprep.subr.mxu0 0.0
      %482 = vmatpush1.xpose.msra.mxu0 %v459
      %483 = vmatprep.subr.mxu0 0.0
      %484 = vmatpush1.xpose.msra.mxu0 %v460
      %485 = vmatprep.subr.mxu0 0.0
      %486 = vmatpush1.xpose.msra.mxu0 %v461
      %487 = vmatprep.subr.mxu0 0.0
      %488 = vmatpush1.xpose.msra.mxu0 %v462
      %489 = vmatprep.subr.mxu0 0.0
      %490 = vmatpush1.xpose.msra.mxu0 %v463
      %491 = vmatprep.subr.mxu0 0.0
      %492 = vmatpush1.xpose.msra.mxu0 %v464
      %493 = vmatprep.subr.mxu0 0.0
      %494 = vmatpush1.xpose.msra.mxu0 %v465
      %495 = vmatprep.subr.mxu0 0.0
      %496 = vmatpush1.xpose.msra.mxu0 %v466
      %497 = vmatprep.subr.mxu0 0.0
      %498 = vmatpush1.xpose.msra.mxu0 %v467
      %499 = vmatprep.subr.mxu0 0.0
      %500 = vmatpush1.xpose.msra.mxu0 %v468
      %501 = vmatprep.subr.mxu0 0.0
      %502 = vmatpush1.xpose.msra.mxu0 0.0
      %503 = vmatprep.subr.mxu0 0.0
      %504 = vmatpush1.xpose.msra.mxu0 0.0
      %505 = vmatprep.subr.mxu0 0.0
      %506 = vmatpush1.xpose.msra.mxu0 0.0
      %507 = vmatprep.subr.mxu0 0.0
      %508 = vmatpush1.xpose.msra.mxu0 0.0
      %509 = vmatprep.subr.mxu0 0.0
      %510 = vmatpush1.xpose.msra.mxu0 0.0
      %511 = vmatprep.subr.mxu0 0.0
      %512 = vmatpush1.xpose.msra.mxu0 0.0
      %513 = vmatprep.subr.mxu0 0.0
      %514 = vmatpush1.xpose.msra.mxu0 0.0
      %515 = vmatprep.subr.mxu0 0.0
      %516 = vmatpush1.xpose.msra.mxu0 0.0
      %517 = vmatprep.subr.mxu0 0.0
      %518 = vmatpush1.xpose.msra.mxu0 0.0
      %519 = vmatprep.subr.mxu0 0.0
      %520 = vmatpush1.xpose.msra.mxu0 0.0
      %521 = vmatprep.subr.mxu0 0.0
      %522 = vmatpush1.xpose.msra.mxu0 0.0
      %523 = vmatprep.subr.mxu0 0.0
      %524 = vmatpush1.xpose.msra.mxu0 0.0
      %525 = vmatprep.subr.mxu0 0.0
      %526 = vmatpush1.xpose.msra.mxu0 0.0
      %527 = vmatprep.subr.mxu0 0.0
      %528 = vmatpush1.xpose.msra.mxu0 0.0
      %529 = vmatprep.subr.mxu0 0.0
      %530 = vmatpush1.xpose.msra.mxu0 0.0
      %531 = vmatprep.subr.mxu0 0.0
      %532 = vmatpush1.xpose.msra.mxu0 0.0
      %533 = vmatprep.mubr.f32.mxu0 0.0
      %534 = vmatmul.mubr.f32.gmra.mrb[0].mxu0 %v365
      %v535 = vpop.f32.mrb[0].mxu0
      %v536 = vadd.f32 0.0, %v535
      %v537 = vpop.f32.mrb[0].mxu0
      %538 = vmatprep.mubr.f32.mxu0 0.0
      %539 = vmatmul.mubr.f32.gmra.mrb[0].mxu0 %v366
      %v540 = vpop.f32.mrb[0].mxu0
      %v541 = vadd.f32 0.0, %v540
      %v542 = vpop.f32.mrb[0].mxu0
      %543 = vmatprep.mubr.f32.mxu0 0.0
      %544 = vmatmul.mubr.f32.gmra.mrb[0].mxu0 %v367
      %v545 = vpop.f32.mrb[0].mxu0
      %v546 = vadd.f32 0.0, %v545
      %v547 = vpop.f32.mrb[0].mxu0
      %548 = vmatprep.mubr.f32.mxu0 0.0
      %549 = vmatmul.mubr.f32.gmra.mrb[0].mxu0 %v368
      %v550 = vpop.f32.mrb[0].mxu0
      %v551 = vadd.f32 0.0, %v550
      %v552 = vpop.f32.mrb[0].mxu0
      %553 = vmatprep.mubr.f32.mxu0 0.0
      %554 = vmatmul.mubr.f32.gmra.mrb[0].mxu0 %v369
      %v555 = vpop.f32.mrb[0].mxu0
      %v556 = vadd.f32 0.0, %v555
      %v557 = vpop.f32.mrb[0].mxu0
      %558 = vmatprep.mubr.f32.mxu0 0.0
      %559 = vmatmul.mubr.f32.gmra.mrb[0].mxu0 %v370
      %v560 = vpop.f32.mrb[0].mxu0
      %v561 = vadd.f32 0.0, %v560
      %v562 = vpop.f32.mrb[0].mxu0
      %563 = vmatprep.mubr.f32.mxu0 0.0
      %564 = vmatmul.mubr.f32.gmra.mrb[0].mxu0 %v371
      %v565 = vpop.f32.mrb[0].mxu0
      %v566 = vadd.f32 0.0, %v565
      %v567 = vpop.f32.mrb[0].mxu0
      %568 = vmatprep.mubr.f32.mxu0 0.0
      %569 = vmatmul.mubr.f32.gmra.mrb[0].mxu0 %v372
      %v570 = vpop.f32.mrb[0].mxu0
      %v571 = vadd.f32 0.0, %v570
      %v572 = vpop.f32.mrb[0].mxu0
      %573 = vdwg.mxu0
      %v574 = vld [vmem:[%s283] sm:$0xff]
      %v575 = vld [vmem:[%s283 + $0x8] sm:$0xff]
      %v576 = vld [vmem:[%s283 + $0x10] sm:$0xff]
      %v577 = vld [vmem:[%s283 + $0x18] sm:$0xff]
      %v578 = vld [vmem:[%s283 + $0x20] sm:$0xff]
      %v579 = vld [vmem:[%s283 + $0x28] sm:$0xff]
      %v580 = vld [vmem:[%s283 + $0x30] sm:$0xff]
      %v581 = vld [vmem:[%s283 + $0x38] sm:$0xff]
      %v582 = vmul.f32 %v536, %v574
      %v583 = vmul.f32 %v541, %v575
      %v584 = vmul.f32 %v546, %v576
      %v585 = vmul.f32 %v551, %v577
      %v586 = vmul.f32 %v556, %v578
      %v587 = vmul.f32 %v561, %v579
      %v588 = vmul.f32 %v566, %v580
      %v589 = vmul.f32 %v571, %v581
      %v590 = vld [vmem:[%s289] sm:$0xff]
      %v591 = vld [vmem:[%s289 + $0x8] sm:$0xff]
      %v592 = vld [vmem:[%s289 + $0x10] sm:$0xff]
      %v593 = vld [vmem:[%s289 + $0x18] sm:$0xff]
      %v594 = vld [vmem:[%s289 + $0x20] sm:$0xff]
      %v595 = vld [vmem:[%s289 + $0x28] sm:$0xff]
      %v596 = vld [vmem:[%s289 + $0x30] sm:$0xff]
      %v597 = vld [vmem:[%s289 + $0x38] sm:$0xff]
      %v598 = vadd.f32 %v582, %v590
      %v599 = vadd.f32 %v583, %v591
      %v600 = vadd.f32 %v584, %v592
      %v601 = vadd.f32 %v585, %v593
      %v602 = vadd.f32 %v586, %v594
      %v603 = vadd.f32 %v587, %v595
      %v604 = vadd.f32 %v588, %v596
      %v605 = vadd.f32 %v589, %v597
      %606 = vmax.xlane.f32.xlu0 %v598
      %v607 = vpop.xlane.xlu0 %606
      %608 = vmax.xlane.f32.xlu0 %v599
      %v609 = vpop.xlane.xlu0 %608
      %610 = vmax.xlane.f32.xlu0 %v600
      %v611 = vpop.xlane.xlu0 %610
      %612 = vmax.xlane.f32.xlu0 %v601
      %v613 = vpop.xlane.xlu0 %612
      %614 = vmax.xlane.f32.xlu0 %v602
      %v615 = vpop.xlane.xlu0 %614
      %616 = vmax.xlane.f32.xlu0 %v603
      %v617 = vpop.xlane.xlu0 %616
      %618 = vmax.xlane.f32.xlu0 %v604
      %v619 = vpop.xlane.xlu0 %618
      %620 = vmax.xlane.f32.xlu0 %v605
      %v621 = vpop.xlane.xlu0 %620
      %v622 = vsub.f32 %v598, %v607
      %v623 = vsub.f32 %v599, %v609
      %v624 = vsub.f32 %v600, %v611
      %v625 = vsub.f32 %v601, %v613
      %v626 = vsub.f32 %v602, %v615
      %v627 = vsub.f32 %v603, %v617
      %v628 = vsub.f32 %v604, %v619
      %v629 = vsub.f32 %v605, %v621
      %v630 = vmul.f32 %v622, 1.442695
      %v631 = vpow.pop %v630
      %v632 = vmul.f32 %v623, 1.442695
      %v633 = vpow.pop %v632
      %v634 = vmul.f32 %v624, 1.442695
      %v635 = vpow.pop %v634
      %v636 = vmul.f32 %v625, 1.442695
      %v637 = vpow.pop %v636
      %v638 = vmul.f32 %v626, 1.442695
      %v639 = vpow.pop %v638
      %v640 = vmul.f32 %v627, 1.442695
      %v641 = vpow.pop %v640
      %v642 = vmul.f32 %v628, 1.442695
      %v643 = vpow.pop %v642
      %v644 = vmul.f32 %v629, 1.442695
      %v645 = vpow.pop %v644
      %646 = vadd.xlane.f32.xlu0 %v631
      %v647 = vpop.xlane.xlu0 %646
      %648 = vadd.xlane.f32.xlu0 %v633
      %v649 = vpop.xlane.xlu0 %648
      %650 = vadd.xlane.f32.xlu0 %v635
      %v651 = vpop.xlane.xlu0 %650
      %652 = vadd.xlane.f32.xlu0 %v637
      %v653 = vpop.xlane.xlu0 %652
      %654 = vadd.xlane.f32.xlu0 %v639
      %v655 = vpop.xlane.xlu0 %654
      %656 = vadd.xlane.f32.xlu0 %v641
      %v657 = vpop.xlane.xlu0 %656
      %658 = vadd.xlane.f32.xlu0 %v643
      %v659 = vpop.xlane.xlu0 %658
      %660 = vadd.xlane.f32.xlu0 %v645
      %v661 = vpop.xlane.xlu0 %660
      %v662 = vrcp.pop %v647
      %v663 = vrcp.pop %v649
      %v664 = vrcp.pop %v651
      %v665 = vrcp.pop %v653
      %v666 = vrcp.pop %v655
      %v667 = vrcp.pop %v657
      %v668 = vrcp.pop %v659
      %v669 = vrcp.pop %v661
      %v670 = vmul.f32 %v631, %v662
      %v671 = vmul.f32 %v633, %v663
      %v672 = vmul.f32 %v635, %v664
      %v673 = vmul.f32 %v637, %v665
      %v674 = vmul.f32 %v639, %v666
      %v675 = vmul.f32 %v641, %v667
      %v676 = vmul.f32 %v643, %v668
      %v677 = vmul.f32 %v645, %v669
      %678 = vmatprep.subr.mxu0 0.0
      %679 = vmatpush1.msra.mxu0 %v453
      %680 = vmatprep.subr.mxu0 0.0
      %681 = vmatpush1.msra.mxu0 %v454
      %682 = vmatprep.subr.mxu0 0.0
      %683 = vmatpush1.msra.mxu0 %v455
      %684 = vmatprep.subr.mxu0 0.0
      %685 = vmatpush1.msra.mxu0 %v456
      %686 = vmatprep.subr.mxu0 0.0
      %687 = vmatpush1.msra.mxu0 %v457
      %688 = vmatprep.subr.mxu0 0.0
      %689 = vmatpush1.msra.mxu0 %v458
      %690 = vmatprep.subr.mxu0 0.0
      %691 = vmatpush1.msra.mxu0 %v459
      %692 = vmatprep.subr.mxu0 0.0
      %693 = vmatpush1.msra.mxu0 %v460
      %694 = vmatprep.subr.mxu0 0.0
      %695 = vmatpush1.msra.mxu0 %v461
      %696 = vmatprep.subr.mxu0 0.0
      %697 = vmatpush1.msra.mxu0 %v462
      %698 = vmatprep.subr.mxu0 0.0
      %699 = vmatpush1.msra.mxu0 %v463
      %700 = vmatprep.subr.mxu0 0.0
      %701 = vmatpush1.msra.mxu0 %v464
      %702 = vmatprep.subr.mxu0 0.0
      %703 = vmatpush1.msra.mxu0 %v465
      %704 = vmatprep.subr.mxu0 0.0
      %705 = vmatpush1.msra.mxu0 %v466
      %706 = vmatprep.subr.mxu0 0.0
      %707 = vmatpush1.msra.mxu0 %v467
      %708 = vmatprep.subr.mxu0 0.0
      %709 = vmatpush1.msra.mxu0 %v468
      %710 = vmatprep.subr.mxu0 0.0
      %711 = vmatpush1.msra.mxu0 0.0
      %712 = vmatprep.subr.mxu0 0.0
      %713 = vmatpush1.msra.mxu0 0.0
      %714 = vmatprep.subr.mxu0 0.0
      %715 = vmatpush1.msra.mxu0 0.0
      %716 = vmatprep.subr.mxu0 0.0
      %717 = vmatpush1.msra.mxu0 0.0
      %718 = vmatprep.subr.mxu0 0.0
      %719 = vmatpush1.msra.mxu0 0.0
      %720 = vmatprep.subr.mxu0 0.0
      %721 = vmatpush1.msra.mxu0 0.0
      %722 = vmatprep.subr.mxu0 0.0
      %723 = vmatpush1.msra.mxu0 0.0
      %724 = vmatprep.subr.mxu0 0.0
      %725 = vmatpush1.msra.mxu0 0.0
      %726 = vmatprep.subr.mxu0 0.0
      %727 = vmatpush1.msra.mxu0 0.0
      %728 = vmatprep.subr.mxu0 0.0
      %729 = vmatpush1.msra.mxu0 0.0
      %730 = vmatprep.subr.mxu0 0.0
      %731 = vmatpush1.msra.mxu0 0.0
      %732 = vmatprep.subr.mxu0 0.0
      %733 = vmatpush1.msra.mxu0 0.0
      %734 = vmatprep.subr.mxu0 0.0
      %735 = vmatpush1.msra.mxu0 0.0
      %736 = vmatprep.subr.mxu0 0.0
      %737 = vmatpush1.msra.mxu0 0.0
      %738 = vmatprep.subr.mxu0 0.0
      %739 = vmatpush1.msra.mxu0 0.0
      %740 = vmatprep.subr.mxu0 0.0
      %741 = vmatpush1.msra.mxu0 0.0
      %742 = vmatprep.mubr.f32.mxu0 0.0
      %743 = vmatmul.mubr.f32.gmra.mrb[0].mxu0 %v670
      %v744 = vpop.f32.mrb[0].mxu0
      %v745 = vadd.f32 0.0, %v744
      %v746 = vpop.f32.mrb[0].mxu0
      %747 = vmatprep.mubr.f32.mxu0 0.0
      %748 = vmatmul.mubr.f32.gmra.mrb[0].mxu0 %v671
      %v749 = vpop.f32.mrb[0].mxu0
      %v750 = vadd.f32 0.0, %v749
      %v751 = vpop.f32.mrb[0].mxu0
      %752 = vmatprep.mubr.f32.mxu0 0.0
      %753 = vmatmul.mubr.f32.gmra.mrb[0].mxu0 %v672
      %v754 = vpop.f32.mrb[0].mxu0
      %v755 = vadd.f32 0.0, %v754
      %v756 = vpop.f32.mrb[0].mxu0
      %757 = vmatprep.mubr.f32.mxu0 0.0
      %758 = vmatmul.mubr.f32.gmra.mrb[0].mxu0 %v673
      %v759 = vpop.f32.mrb[0].mxu0
      %v760 = vadd.f32 0.0, %v759
      %v761 = vpop.f32.mrb[0].mxu0
      %762 = vmatprep.mubr.f32.mxu0 0.0
      %763 = vmatmul.mubr.f32.gmra.mrb[0].mxu0 %v674
      %v764 = vpop.f32.mrb[0].mxu0
      %v765 = vadd.f32 0.0, %v764
      %v766 = vpop.f32.mrb[0].mxu0
      %767 = vmatprep.mubr.f32.mxu0 0.0
      %768 = vmatmul.mubr.f32.gmra.mrb[0].mxu0 %v675
      %v769 = vpop.f32.mrb[0].mxu0
      %v770 = vadd.f32 0.0, %v769
      %v771 = vpop.f32.mrb[0].mxu0
      %772 = vmatprep.mubr.f32.mxu0 0.0
      %773 = vmatmul.mubr.f32.gmra.mrb[0].mxu0 %v676
      %v774 = vpop.f32.mrb[0].mxu0
      %v775 = vadd.f32 0.0, %v774
      %v776 = vpop.f32.mrb[0].mxu0
      %777 = vmatprep.mubr.f32.mxu0 0.0
      %778 = vmatmul.mubr.f32.gmra.mrb[0].mxu0 %v677
      %v779 = vpop.f32.mrb[0].mxu0
      %v780 = vadd.f32 0.0, %v779
      %v781 = vpop.f32.mrb[0].mxu0
      %782 = vdwg.mxu0
      %783 = vst [vmem:[%s299] sm:$0xff] %v745
      %784 = vst [vmem:[%s299 + $0x8] sm:$0xff] %v750
      %785 = vst [vmem:[%s299 + $0x10] sm:$0xff] %v755
      %786 = vst [vmem:[%s299 + $0x18] sm:$0xff] %v760
      %787 = vst [vmem:[%s299 + $0x20] sm:$0xff] %v765
      %788 = vst [vmem:[%s299 + $0x28] sm:$0xff] %v770
      %789 = vst [vmem:[%s299 + $0x30] sm:$0xff] %v775
      %790 = vst [vmem:[%s299 + $0x38] sm:$0xff] %v780
      %s791 = smul.u32 8, %s20
      %p792 = scmp.lt.s32.totalorder %s19, 1
      %s793 = scalar_select %p792, %s19, 1
      %p794 = scmp.lt.s32.totalorder %s791, 7
      %s795 = scalar_select %p794, %s791, 7
      %s796 = smul.addr %s793, 8
      %s797 = sadd.s32 %s795, %s796
      %s798 = smul.addr %s797, 8
      %s799 = scalar_lea.vmem %s4, %s798
      // Predicated region
      $region37: #{_lambda_.1} parent=35 // pred_check
        %p800 = pneg %p153
      $region38: #{_lambda_.1} parent=35 // pred_check_branch
        %802 = sbr.rel (%p800) target = $region40
      $region39: #{_lambda_.1} parent=35 // pred_region
        %s803 = smul.u32 8, %s20
      $region40: #{_lambda_.1} parent=35 // pred_fallthru
        _
    $region36: #{_lambda_.1} parent=5 // pred_fallthru
      _
    %p804 = scmp.le.s32.totalorder 2, %s10
    // Predicated region
    $region41: #{_lambda_.1} parent=5 // pred_check
      %p805 = pneg %p804
    $region42: #{_lambda_.1} parent=5 // pred_check_branch
      %807 = sbr.rel (%p805) target = $region44
    $region43: #{_lambda_.1} parent=5 // pred_region
      %s808 = ssub.s32 %s10, 2
      // Predicated region
      $region45: #{_lambda_.1} parent=43 // pred_check
        %p809 = pneg %p159
      $region46: #{_lambda_.1} parent=43 // pred_check_branch
        %811 = sbr.rel (%p809) target = $region48
      $region47: #{_lambda_.1} parent=43 // pred_region
        %s812 = smul.u32 8, %s22
        %p813 = scmp.lt.s32.totalorder %s21, 1
        %s814 = scalar_select %p813, %s21, 1
        %p815 = scmp.lt.s32.totalorder %s812, 7
        %s816 = scalar_select %p815, %s812, 7
        %s817 = smul.addr %s814, 8
        %s818 = sadd.s32 %s816, %s817
        %s819 = smul.addr %s818, 8
        %s820 = scalar_lea.vmem %s4, %s819
      $region48: #{_lambda_.1} parent=43 // pred_fallthru
        _
    $region44: #{_lambda_.1} parent=5 // pred_fallthru
      _
  $region6: #{_lambda_.1} parent=0 // loop_footer
    %s14 = sadd.s32 1, %s10
  $region7: #{_lambda_.1} parent=0 // loop_footer_branch
    %9 = sbr.rel target = $region3
  $region8: #{_lambda_.1} parent=0 // loop_exit
    _

</llo_original>
